<compile_context>
chip_gen: v6e
topology: v6e:2x2x1
jax: 0.10.0
libtpu: 0.0.40
codegen_flags: <defaults>
</compile_context>

<pallas_src>
import functools
import math

import jax
import jax.numpy as jnp
from jax import lax
from jax.experimental import pallas as pl
from jax.experimental.pallas import tpu as pltpu

_HALF_LOG_2PI = 0.5 * math.log(2.0 * math.pi)
_STD_EPS = 1e-3


def _mc_nll_kernel(pred_ref, tgt_ref, out_ref, *,
                   mc, bt, tile_elems, valid_n, padded_n, inv_mc, inv_mc_m1):
    """One grid step: accumulate the per-element Gaussian log-prob (constant folded
    out) of `bt` dense (R, 128) tiles into the resident (1, R, 128) output block."""
    j = pl.program_id(1)

    @pl.when(j == 0)
    def _init():
        out_ref[...] = jnp.zeros_like(out_ref)

    has_pad = padded_n != valid_n                      # static Python bool
    if has_pad:
        # Global chunk index (only needed to mask the padded tail elements).
        chunk = pl.program_id(0) * pl.num_programs(1) + j

    _, rows, lanes = tgt_ref.shape                     # (R, 128), static

    for ti in range(bt):                               # static unroll over tiles
        t = tgt_ref[ti]                                # (R, 128) f32
        s1 = jnp.zeros_like(t)
        s2 = jnp.zeros_like(t)
        # One pass over the MC samples: target-shifted sufficient statistics.
        for i in range(mc):                            # static unroll, mc is small
            y = pred_ref[i, ti].astype(jnp.float32) - t
            s1 = s1 + y
            s2 = s2 + y * y
        m = s1 * inv_mc                                # = mu - t
        var = jnp.maximum((s2 - mc * (m * m)) * inv_mc_m1, 0.0)   # unbiased (ddof=1)
        std = jnp.sqrt(var) + _STD_EPS
        z = m * pl.reciprocal(std, approx=True)        # z^2 == ((t - mu)/std)^2
        # log N(t | mu, std) + 0.5*log(2*pi)  (constant folded out on the host)
        logp = -0.5 * (z * z) - jnp.log(std)

        if has_pad and ti == bt - 1:
            # Only the globally-last tile contains padded elements; mask them.
            base = (chunk * bt + ti) * tile_elems
            ridx = (lax.broadcasted_iota(jnp.int32, (rows, lanes), 0) * lanes
                    + lax.broadcasted_iota(jnp.int32, (rows, lanes), 1))
            logp = jnp.where(base + ridx < valid_n, logp, 0.0)

        out_ref[...] += logp[None]


def mc_nll(pred, target, num_samples, *, max_tiles_per_step=64,
           vmem_pipeline_budget_bytes=16 * 1024 * 1024):
    """Pallas TPU implementation of MC_NLL(num_samples).forward(pred, target)."""
    assert pred.ndim == target.ndim + 1
    assert pred.shape[1:] == target.shape
    mc = pred.shape[0]
    # torch.std with 1 sample is NaN; require >= 2 MC samples for a finite loss.
    assert mc >= 2, "MC_NLL needs >= 2 MC samples"

    n = math.prod(target.shape)
    itemsize = jnp.dtype(pred.dtype).itemsize
    rows = 8 * max(1, 4 // itemsize)        # 8 (f32) / 16 (bf16,f16) / 32 (8-bit)
    tile_elems = rows * 128                 # elements per dense (R, 128) tile

    pred2 = pred.reshape(mc, n)             # keep input dtype through the DMA
    tgt2 = target.reshape(n).astype(jnp.float32)

    t_total = -(-n // tile_elems)           # ceil(n / tile_elems)
    padded_n = t_total * tile_elems
    if padded_n != n:
        # TODO(synk): this pad materializes one copy of pred; a manually-DMA'd tail
        # path would avoid it for very large non-tile-aligned inputs.
        pred2 = jnp.pad(pred2, ((0, 0), (0, padded_n - n)))
        tgt2 = jnp.pad(tgt2, (0, padded_n - n))

    pred4 = pred2.reshape(mc, t_total, rows, 128)   # bitcast-reshape when aligned
    tgt3 = tgt2.reshape(t_total, rows, 128)

    # ---- choose tiles-per-step (bt) and the chunk grid -------------------------
    # In this layout the blocks have no sublane padding, so the double-buffered
    # pipeline bytes per tile are exact.
    bytes_per_tile = 2 * (mc * tile_elems * itemsize + tile_elems * 4)
    bt_budget = max(1, vmem_pipeline_budget_bytes // bytes_per_tile)
    bt_cap = max(1, min(bt_budget, max_tiles_per_step, t_total))

    # Largest divisor of t_total <= bt_cap; prefer (within 2x) one whose cofactor
    # (chunk count) is even so the "parallel" axis can split across v7x's two TCs.
    divisors = [d for d in range(1, bt_cap + 1) if t_total % d == 0]
    best_any = max(divisors)
    even_ok = [d for d in divisors if (t_total // d) % 2 == 0 and d * 2 >= best_any]
    bt = max(even_ok) if even_ok else best_any
    n_chunks = t_total // bt
    num_par = 2 if n_chunks % 2 == 0 else 1
    inner = n_chunks // num_par

    # ---- scoped VMEM request from the real block sizes -------------------------
    pred_blk = mc * bt * tile_elems * itemsize
    tgt_blk = bt * tile_elems * 4
    out_blk = tile_elems * 4
    vmem_limit = int(min(40 * 1024 * 1024,
                         max(16 * 1024 * 1024,
                             2 * (pred_blk + tgt_blk) + out_blk + 6 * 1024 * 1024)))

    kernel = functools.partial(
        _mc_nll_kernel, mc=mc, bt=bt, tile_elems=tile_elems,
        valid_n=n, padded_n=padded_n, inv_mc=1.0 / mc, inv_mc_m1=1.0 / (mc - 1))

    out = pl.pallas_call(
        kernel,
        out_shape=jax.ShapeDtypeStruct((num_par, rows, 128), jnp.float32),
        grid_spec=pltpu.PrefetchScalarGridSpec(
            num_scalar_prefetch=0,
            grid=(num_par, inner),
            in_specs=[
                pl.BlockSpec((mc, bt, rows, 128),
                             lambda c, j, inner=inner: (0, c * inner + j, 0, 0)),
                pl.BlockSpec((bt, rows, 128),
                             lambda c, j, inner=inner: (c * inner + j, 0, 0)),
            ],
            out_specs=pl.BlockSpec((1, rows, 128), lambda c, j: (c, 0, 0)),
        ),
        compiler_params=pltpu.CompilerParams(
            dimension_semantics=("parallel", "arbitrary"),
            vmem_limit_bytes=vmem_limit,
        ),
    )(pred4, tgt3)

    total_logp = jnp.sum(out)                      # tiny (num_par, R, 128) reduce
    mean_logp = total_logp / n - _HALF_LOG_2PI     # fold the 0.5*log(2*pi) constant
    return -mean_logp * num_samples


def _reference(pred, target, num_samples):
    p = pred.astype(jnp.float32)
    mu = jnp.mean(p, axis=0)
    std = jnp.std(p, axis=0, ddof=1) + _STD_EPS
    logp = -0.5 * ((target - mu) / std) ** 2 - jnp.log(std) - _HALF_LOG_2PI
    return -jnp.mean(logp) * num_samples


if __name__ == "__main__":
    key = jax.random.PRNGKey(0)
    k1, k2, k3, k4, k5, k6, k7, k8 = jax.random.split(key, 8)
    # Tolerances: pl.reciprocal(approx=True) trades ~1e-4-level relative error in
    # the z^2 term for EUP throughput, so compare at 2e-3.
    TOL = dict(rtol=2e-3, atol=2e-3)

    # Case 1: f32 pred, N = 16*128 = 2048 -> two dense 1024-elem tiles, 2-way grid.
    MC, B, D = 8, 16, 128
    target = jax.random.normal(k1, (B, D), dtype=jnp.float32)
    pred = target[None] + 0.5 * jax.random.normal(k2, (MC, B, D), dtype=jnp.float32)
    got = jax.block_until_ready(mc_nll(pred, target, B * D))
    assert jnp.allclose(got, _reference(pred, target, B * D), **TOL), got

    # Case 2: bf16 pred (packed (16,128) tiles through the DMA), f32 target.
    MCb, Bb, Db = 8, 8, 512
    tgt_b = jax.random.normal(k3, (Bb, Db), dtype=jnp.float32)
    pred_b = (tgt_b[None] + 0.5 * jax.random.normal(
        k4, (MCb, Bb, Db), dtype=jnp.float32)).astype(jnp.bfloat16)
    got_b = jax.block_until_ready(mc_nll(pred_b, tgt_b, Bb * Db))
    assert jnp.allclose(got_b, _reference(pred_b, tgt_b, Bb * Db), **TOL), got_b

    # Case 3: N not a multiple of the tile (exercises the padded/masked path).
    tgt_c = jax.random.normal(k5, (3, 400), dtype=jnp.float32)            # N = 1200
    pred_c = tgt_c[None] + 0.3 * jax.random.normal(k6, (6, 3, 400), jnp.float32)
    got_c = jax.block_until_ready(mc_nll(pred_c, tgt_c, 1200))
    assert jnp.allclose(got_c, _reference(pred_c, tgt_c, 1200), **TOL), got_c

    # Case 4: multi-step reduction along the "arbitrary" axis (forced tiny chunks).
    tgt_d = jax.random.normal(k7, (64, 128), dtype=jnp.float32)           # N = 8192
    pred_d = tgt_d[None] + 0.7 * jax.random.normal(k8, (4, 64, 128), jnp.float32)
    got_d = jax.block_until_ready(mc_nll(pred_d, tgt_d, 8192, max_tiles_per_step=1))
    assert jnp.allclose(got_d, _reference(pred_d, tgt_d, 8192), **TOL), got_d

    print("KERNEL_OK")
</pallas_src>

<mosaic_0001>
module attributes {stable_mosaic.version = 11 : i64} {
  func.func @_mc_nll_kernel(%arg0: i32, %arg1: i32, %arg2: memref<8x1x8x128xf32, #tpu.memory_space<vmem>>, %arg3: memref<1x8x128xf32, #tpu.memory_space<vmem>>, %arg4: memref<1x8x128xf32, #tpu.memory_space<vmem>>) attributes {dimension_semantics = [#tpu.dimension_semantics<parallel>, #tpu.dimension_semantics<arbitrary>], iteration_bounds = array<i64: 2, 1>, scalar_prefetch = 0 : i64, scratch_operands = 0 : i64, tpu.core_type = #tpu.core_type<tc>, window_params = [{transform_indices = @transform_0, window_bounds = array<i64: 8, 1, 8, 128>}, {transform_indices = @transform_1, window_bounds = array<i64: 1, 8, 128>}, {transform_indices = @transform_2, window_bounds = array<i64: 1, 8, 128>}]} {
    %c0_i32 = arith.constant 0 : i32
    %0 = arith.cmpi eq, %arg1, %c0_i32 : i32
    %1 = arith.extui %0 : i1 to i32
    %c0_i32_0 = arith.constant 0 : i32
    %2 = arith.cmpi ne, %1, %c0_i32_0 : i32
    scf.if %2 {
      %cst_41 = arith.constant 0.000000e+00 : f32
      %79 = vector.broadcast %cst_41 : f32 to vector<1x8x128xf32>
      %c0_42 = arith.constant 0 : index
      %c0_43 = arith.constant 0 : index
      %c0_44 = arith.constant 0 : index
      %80 = vector.load %arg4[%c0_42, %c0_43, %c0_44] : memref<1x8x128xf32, #tpu.memory_space<vmem>>, vector<1x8x128xf32>
      tpu.vector_store %arg4[%c0_42, %c0_43, %c0_44], %79 {strides = array<i32>} : memref<1x8x128xf32, #tpu.memory_space<vmem>>, vector<1x8x128xf32>,
    } else {
    }
    %c0 = arith.constant 0 : index
    %c0_1 = arith.constant 0 : index
    %c0_2 = arith.constant 0 : index
    %3 = vector.load %arg3[%c0, %c0_1, %c0_2] : memref<1x8x128xf32, #tpu.memory_space<vmem>>, vector<1x8x128xf32>
    %4 = vector.shape_cast %3 : vector<1x8x128xf32> to vector<8x128xf32>
    %cst = arith.constant 0.000000e+00 : f32
    %5 = vector.broadcast %cst : f32 to vector<8x128xf32>
    %cst_3 = arith.constant 0.000000e+00 : f32
    %6 = vector.broadcast %cst_3 : f32 to vector<8x128xf32>
    %c0_4 = arith.constant 0 : index
    %c0_5 = arith.constant 0 : index
    %c0_6 = arith.constant 0 : index
    %c0_7 = arith.constant 0 : index
    %7 = vector.load %arg2[%c0_4, %c0_5, %c0_6, %c0_7] : memref<8x1x8x128xf32, #tpu.memory_space<vmem>>, vector<1x1x8x128xf32>
    %8 = vector.shape_cast %7 : vector<1x1x8x128xf32> to vector<8x128xf32>
    %9 = arith.subf %8, %4 : vector<8x128xf32>
    %10 = arith.addf %5, %9 : vector<8x128xf32>
    %11 = arith.mulf %9, %9 : vector<8x128xf32>
    %12 = arith.addf %6, %11 : vector<8x128xf32>
    %c1 = arith.constant 1 : index
    %c0_8 = arith.constant 0 : index
    %c0_9 = arith.constant 0 : index
    %c0_10 = arith.constant 0 : index
    %13 = vector.load %arg2[%c1, %c0_8, %c0_9, %c0_10] : memref<8x1x8x128xf32, #tpu.memory_space<vmem>>, vector<1x1x8x128xf32>
    %14 = vector.shape_cast %13 : vector<1x1x8x128xf32> to vector<8x128xf32>
    %15 = arith.subf %14, %4 : vector<8x128xf32>
    %16 = arith.addf %10, %15 : vector<8x128xf32>
    %17 = arith.mulf %15, %15 : vector<8x128xf32>
    %18 = arith.addf %12, %17 : vector<8x128xf32>
    %c2 = arith.constant 2 : index
    %c0_11 = arith.constant 0 : index
    %c0_12 = arith.constant 0 : index
    %c0_13 = arith.constant 0 : index
    %19 = vector.load %arg2[%c2, %c0_11, %c0_12, %c0_13] : memref<8x1x8x128xf32, #tpu.memory_space<vmem>>, vector<1x1x8x128xf32>
    %20 = vector.shape_cast %19 : vector<1x1x8x128xf32> to vector<8x128xf32>
    %21 = arith.subf %20, %4 : vector<8x128xf32>
    %22 = arith.addf %16, %21 : vector<8x128xf32>
    %23 = arith.mulf %21, %21 : vector<8x128xf32>
    %24 = arith.addf %18, %23 : vector<8x128xf32>
    %c3 = arith.constant 3 : index
    %c0_14 = arith.constant 0 : index
    %c0_15 = arith.constant 0 : index
    %c0_16 = arith.constant 0 : index
    %25 = vector.load %arg2[%c3, %c0_14, %c0_15, %c0_16] : memref<8x1x8x128xf32, #tpu.memory_space<vmem>>, vector<1x1x8x128xf32>
    %26 = vector.shape_cast %25 : vector<1x1x8x128xf32> to vector<8x128xf32>
    %27 = arith.subf %26, %4 : vector<8x128xf32>
    %28 = arith.addf %22, %27 : vector<8x128xf32>
    %29 = arith.mulf %27, %27 : vector<8x128xf32>
    %30 = arith.addf %24, %29 : vector<8x128xf32>
    %c4 = arith.constant 4 : index
    %c0_17 = arith.constant 0 : index
    %c0_18 = arith.constant 0 : index
    %c0_19 = arith.constant 0 : index
    %31 = vector.load %arg2[%c4, %c0_17, %c0_18, %c0_19] : memref<8x1x8x128xf32, #tpu.memory_space<vmem>>, vector<1x1x8x128xf32>
    %32 = vector.shape_cast %31 : vector<1x1x8x128xf32> to vector<8x128xf32>
    %33 = arith.subf %32, %4 : vector<8x128xf32>
    %34 = arith.addf %28, %33 : vector<8x128xf32>
    %35 = arith.mulf %33, %33 : vector<8x128xf32>
    %36 = arith.addf %30, %35 : vector<8x128xf32>
    %c5 = arith.constant 5 : index
    %c0_20 = arith.constant 0 : index
    %c0_21 = arith.constant 0 : index
    %c0_22 = arith.constant 0 : index
    %37 = vector.load %arg2[%c5, %c0_20, %c0_21, %c0_22] : memref<8x1x8x128xf32, #tpu.memory_space<vmem>>, vector<1x1x8x128xf32>
    %38 = vector.shape_cast %37 : vector<1x1x8x128xf32> to vector<8x128xf32>
    %39 = arith.subf %38, %4 : vector<8x128xf32>
    %40 = arith.addf %34, %39 : vector<8x128xf32>
    %41 = arith.mulf %39, %39 : vector<8x128xf32>
    %42 = arith.addf %36, %41 : vector<8x128xf32>
    %c6 = arith.constant 6 : index
    %c0_23 = arith.constant 0 : index
    %c0_24 = arith.constant 0 : index
    %c0_25 = arith.constant 0 : index
    %43 = vector.load %arg2[%c6, %c0_23, %c0_24, %c0_25] : memref<8x1x8x128xf32, #tpu.memory_space<vmem>>, vector<1x1x8x128xf32>
    %44 = vector.shape_cast %43 : vector<1x1x8x128xf32> to vector<8x128xf32>
    %45 = arith.subf %44, %4 : vector<8x128xf32>
    %46 = arith.addf %40, %45 : vector<8x128xf32>
    %47 = arith.mulf %45, %45 : vector<8x128xf32>
    %48 = arith.addf %42, %47 : vector<8x128xf32>
    %c7 = arith.constant 7 : index
    %c0_26 = arith.constant 0 : index
    %c0_27 = arith.constant 0 : index
    %c0_28 = arith.constant 0 : index
    %49 = vector.load %arg2[%c7, %c0_26, %c0_27, %c0_28] : memref<8x1x8x128xf32, #tpu.memory_space<vmem>>, vector<1x1x8x128xf32>
    %50 = vector.shape_cast %49 : vector<1x1x8x128xf32> to vector<8x128xf32>
    %51 = arith.subf %50, %4 : vector<8x128xf32>
    %52 = arith.addf %46, %51 : vector<8x128xf32>
    %53 = arith.mulf %51, %51 : vector<8x128xf32>
    %54 = arith.addf %48, %53 : vector<8x128xf32>
    %cst_29 = arith.constant 1.250000e-01 : f32
    %55 = vector.broadcast %cst_29 : f32 to vector<8x128xf32>
    %56 = arith.mulf %52, %55 : vector<8x128xf32>
    %57 = arith.mulf %56, %56 : vector<8x128xf32>
    %cst_30 = arith.constant 8.000000e+00 : f32
    %58 = vector.broadcast %cst_30 : f32 to vector<8x128xf32>
    %59 = arith.mulf %58, %57 : vector<8x128xf32>
    %60 = arith.subf %54, %59 : vector<8x128xf32>
    %cst_31 = arith.constant 0.142857149 : f32
    %61 = vector.broadcast %cst_31 : f32 to vector<8x128xf32>
    %62 = arith.mulf %60, %61 : vector<8x128xf32>
    %cst_32 = arith.constant 0.000000e+00 : f32
    %63 = vector.broadcast %cst_32 : f32 to vector<8x128xf32>
    %64 = arith.maximumf %62, %63 : vector<8x128xf32>
    %65 = math.sqrt %64 : vector<8x128xf32>
    %cst_33 = arith.constant 1.000000e-03 : f32
    %66 = vector.broadcast %cst_33 : f32 to vector<8x128xf32>
    %67 = arith.addf %65, %66 : vector<8x128xf32>
    %68 = tpu.reciprocal %67 {approx = true} : vector<8x128xf32> -> vector<8x128xf32>
    %69 = arith.mulf %56, %68 : vector<8x128xf32>
    %70 = arith.mulf %69, %69 : vector<8x128xf32>
    %cst_34 = arith.constant -5.000000e-01 : f32
    %71 = vector.broadcast %cst_34 : f32 to vector<8x128xf32>
    %72 = arith.mulf %71, %70 : vector<8x128xf32>
    %73 = math.log %67 : vector<8x128xf32>
    %74 = arith.subf %72, %73 : vector<8x128xf32>
    %c0_35 = arith.constant 0 : index
    %c0_36 = arith.constant 0 : index
    %c0_37 = arith.constant 0 : index
    %75 = vector.load %arg4[%c0_35, %c0_36, %c0_37] : memref<1x8x128xf32, #tpu.memory_space<vmem>>, vector<1x8x128xf32>
    %76 = vector.shape_cast %74 : vector<8x128xf32> to vector<1x8x128xf32>
    %77 = arith.addf %75, %76 : vector<1x8x128xf32>
    %c0_38 = arith.constant 0 : index
    %c0_39 = arith.constant 0 : index
    %c0_40 = arith.constant 0 : index
    %78 = vector.load %arg4[%c0_38, %c0_39, %c0_40] : memref<1x8x128xf32, #tpu.memory_space<vmem>>, vector<1x8x128xf32>
    tpu.vector_store %arg4[%c0_38, %c0_39, %c0_40], %77 {strides = array<i32>} : memref<1x8x128xf32, #tpu.memory_space<vmem>>, vector<1x8x128xf32>,
    return
  }
  func.func @transform_0(%arg0: i32, %arg1: i32) -> (i32, i32, i32, i32) {
    %c1_i32 = arith.constant 1 : i32
    %0 = arith.muli %arg0, %c1_i32 : i32
    %1 = arith.addi %0, %arg1 : i32
    %c0_i32 = arith.constant 0 : i32
    %c0_i32_0 = arith.constant 0 : i32
    %c0_i32_1 = arith.constant 0 : i32
    %c0_i32_2 = arith.constant 0 : i32
    return %c0_i32, %1, %c0_i32_0, %c0_i32_1 : i32, i32, i32, i32
  }
  func.func @transform_1(%arg0: i32, %arg1: i32) -> (i32, i32, i32) {
    %c1_i32 = arith.constant 1 : i32
    %0 = arith.muli %arg0, %c1_i32 : i32
    %1 = arith.addi %0, %arg1 : i32
    %c0_i32 = arith.constant 0 : i32
    %c0_i32_0 = arith.constant 0 : i32
    %c0_i32_1 = arith.constant 0 : i32
    return %1, %c0_i32, %c0_i32_0 : i32, i32, i32
  }
  func.func @transform_2(%arg0: i32, %arg1: i32) -> (i32, i32, i32) {
    %c0_i32 = arith.constant 0 : i32
    %c0_i32_0 = arith.constant 0 : i32
    %c0_i32_1 = arith.constant 0 : i32
    return %arg0, %c0_i32, %c0_i32_0 : i32, i32, i32
  }
}

</mosaic_0001>

<llo_original>
// kernel: tpu_custom_call.1
$region0: #{tpu_custom_call.1}
  #allocation0 [shape = 'u32[]', space=smem, size = 0x4, offset = 0x4, fixed_abs, tag = 'smem constant byte address 0x4 - core index']
  #allocation1 [shape = 'u32[144,128]{1,0:T(1,128)}', space=vmem, size = 0x12000, scoped, tag = 'internal scratch']
  %s0 = inlined_call_operand.hbm [shape: f32[8,2,8,128], index: 0, kind: input, shape index: {}]
  %s1 = inlined_call_operand.hbm [shape: f32[2,8,128], index: 1, kind: input, shape index: {}]
  %s2 = inlined_call_operand.hbm [shape: f32[2,8,128], index: 2, kind: output, shape index: {}]
  %s3 = sld [smem:[#allocation0]]
  $region53: #{tpu_custom_call.1} parent=0
    _
  %s5 = ssub.s32 1, %s3
  %s6 = scalar_select 0, %s5, %s3
  $region1: #{tpu_custom_call.1} parent=0
    #allocation2 [shape = 'u8[65536]{0}', space=vmem, size = 0x10000, scoped, tag = 'input window, operand 0']
    #allocation3 [shape = 's32[2]{0}', space=sflag, size = 0x8, scoped, tag = 'scoped memory for tpu_custom_call.1']
    #allocation4 [shape = 's32[2]{0}', space=sflag, size = 0x8, scoped, tag = 'scoped memory for tpu_custom_call.1']
    #allocation5 [shape = 'u8[8192]{0}', space=vmem, size = 0x2000, scoped, tag = 'input window, operand 1']
    #allocation6 [shape = 's32[2]{0}', space=sflag, size = 0x8, scoped, tag = 'scoped memory for tpu_custom_call.1']
    #allocation7 [shape = 'u8[8192]{0}', space=vmem, size = 0x2000, scoped, tag = 'output window, operand 0']
    %7 = vsyncpa [#allocation3], 0
    %s8 = scalar_lea.sflag [#allocation3], 1
    %9 = vsyncpa %s8, 0
    %10 = vsyncpa [#allocation6], 0
    %s11 = scalar_lea.sflag [#allocation6], 1
    %12 = vsyncpa %s11, 0
    %13 = vsyncpa [#allocation4], 0
    %s14 = scalar_lea.sflag [#allocation4], 1
    %15 = vsyncpa %s14, 0
    loop: start=0, step=1, limit=4
    $region2: #{tpu_custom_call.1} parent=1 // loop_pre_header
      _
    $region3: #{tpu_custom_call.1} parent=1 // loop_header
      %s17 = sphi 0, %s21
      %p18 = scmp.ge.s32.totalorder %s17, 4
      %s24 = sphi 0, %s36
      %s25 = sphi 0, %s32
      %s26 = sphi 0, %s24
      %s27 = sphi 0, %s25
      %s28 = sphi 0, %s26
      %s29 = sphi 0, %s27
      %s41 = sphi 0, %s43
      %s44 = sphi 0, %s41
      %s45 = sphi 0, %s44
      %s61 = sphi 0, %s45
      %s69 = sphi 0, %s71
      %s72 = sphi 0, %s69
      %s73 = sphi 0, %s72
      %s89 = sphi 0, %s73
      %s95 = sphi 0, %s97
      %s98 = sphi 0, %s95
      %s99 = sphi 0, %s98
      %s115 = sphi 0, %s99
    $region4: #{tpu_custom_call.1} parent=1 // loop_header_branch
      %20 = sbr.rel (%p18) target = $region8
    $region5: #{tpu_custom_call.1} parent=1 // loop_body
      %s22 = ssub.s32 %s17, 1
      %s23 = ssub.s32 %s17, 2
      %s30 = sadd.s32 1, %s25
      %p31 = scmp.ge.s32.totalorder %s30, 1
      %s32 = scalar_select %p31, 0, %s30
      %s33 = sadd.s32 1, %s24
      %s34 = scalar_select %p31, %s33, %s24
      %p35 = scmp.ge.s32.totalorder %s34, 2
      %s36 = scalar_select %p35, 0, %s34
      %s37 = sadd.s32 %s24, %s25
      %s38 = sadd.s32 %s36, %s32
      %s39 = ssub.s32 %s37, %s38
      %p40 = scmp.eq.s32.totalorder %s39, 0
      %s42 = sadd.s32 %s41, 1
      %s43 = scalar_select %p40, %s41, %s42
      %p46 = pneg %p40
      %p47 = scmp.eq.s32.totalorder %s17, 1
      %p48 = por %p46, %p47
      %p49 = scmp.ne.s32.totalorder %s41, %s44
      %p50 = scmp.eq.s32.totalorder %s17, 0
      %p51 = por %p49, %p50
      %p52 = scmp.ne.s32.totalorder %s41, %s44
      %p53 = scmp.eq.s32.totalorder %s22, 1
      %p54 = por %p52, %p53
      %p55 = scmp.ne.s32.totalorder %s44, %s45
      %p56 = scmp.eq.s32.totalorder %s22, 0
      %p57 = por %p55, %p56
      %p58 = scmp.ne.s32.totalorder %s44, %s45
      %p59 = scmp.eq.s32.totalorder %s23, 1
      %p60 = por %p58, %p59
      %p62 = scmp.ne.s32.totalorder %s45, %s61
      %p63 = scmp.eq.s32.totalorder %s23, 0
      %p64 = por %p62, %p63
      %s65 = sadd.s32 %s24, %s25
      %s66 = sadd.s32 %s36, %s32
      %s67 = ssub.s32 %s65, %s66
      %p68 = scmp.eq.s32.totalorder %s67, 0
      %s70 = sadd.s32 %s69, 1
      %s71 = scalar_select %p68, %s69, %s70
      %p74 = pneg %p68
      %p75 = scmp.eq.s32.totalorder %s17, 1
      %p76 = por %p74, %p75
      %p77 = scmp.ne.s32.totalorder %s69, %s72
      %p78 = scmp.eq.s32.totalorder %s17, 0
      %p79 = por %p77, %p78
      %p80 = scmp.ne.s32.totalorder %s69, %s72
      %p81 = scmp.eq.s32.totalorder %s22, 1
      %p82 = por %p80, %p81
      %p83 = scmp.ne.s32.totalorder %s72, %s73
      %p84 = scmp.eq.s32.totalorder %s22, 0
      %p85 = por %p83, %p84
      %p86 = scmp.ne.s32.totalorder %s72, %s73
      %p87 = scmp.eq.s32.totalorder %s23, 1
      %p88 = por %p86, %p87
      %p90 = scmp.ne.s32.totalorder %s73, %s89
      %p91 = scmp.eq.s32.totalorder %s23, 0
      %p92 = por %p90, %p91
      %s93 = ssub.s32 %s24, %s36
      %p94 = scmp.eq.s32.totalorder %s93, 0
      %s96 = sadd.s32 %s95, 1
      %s97 = scalar_select %p94, %s95, %s96
      %p100 = pneg %p94
      %p101 = scmp.eq.s32.totalorder %s17, 1
      %p102 = por %p100, %p101
      %p103 = scmp.ne.s32.totalorder %s95, %s98
      %p104 = scmp.eq.s32.totalorder %s17, 0
      %p105 = por %p103, %p104
      %p106 = scmp.ne.s32.totalorder %s95, %s98
      %p107 = scmp.eq.s32.totalorder %s22, 1
      %p108 = por %p106, %p107
      %p109 = scmp.ne.s32.totalorder %s98, %s99
      %p110 = scmp.eq.s32.totalorder %s22, 0
      %p111 = por %p109, %p110
      %p112 = scmp.ne.s32.totalorder %s98, %s99
      %p113 = scmp.eq.s32.totalorder %s23, 1
      %p114 = por %p112, %p113
      %p116 = scmp.ne.s32.totalorder %s99, %s115
      %p117 = scmp.eq.s32.totalorder %s23, 0
      %p118 = por %p116, %p117
      %p119 = scmp.le.s32.totalorder 1, %s17
      %p120 = scmp.lt.s32.totalorder %s17, 3
      %p121 = pnand %p119, %p120
      %p122 = pneg %p121
      // Predicated region
      $region9: #{tpu_custom_call.1} parent=5 // pred_check
        _
      $region10: #{tpu_custom_call.1} parent=5 // pred_check_branch
        %124 = sbr.rel (%p121) target = $region12
      $region11: #{tpu_custom_call.1} parent=5 // pred_region
        %s125 = ssub.s32 %s17, 1
      $region12: #{tpu_custom_call.1} parent=5 // pred_fallthru
        _
      %p126 = scmp.lt.s32.totalorder %s17, 2
      // Predicated region
      $region13: #{tpu_custom_call.1} parent=5 // pred_check
        %p127 = pneg %p126
      $region14: #{tpu_custom_call.1} parent=5 // pred_check_branch
        %129 = sbr.rel (%p127) target = $region16
      $region15: #{tpu_custom_call.1} parent=5 // pred_region
        // Predicated region
        $region17: #{tpu_custom_call.1} parent=15 // pred_check
          %p130 = pneg %p51
        $region18: #{tpu_custom_call.1} parent=15 // pred_check_branch
          %132 = sbr.rel (%p130) target = $region20
        $region19: #{tpu_custom_call.1} parent=15 // pred_region
          %s133 = sand.u32 %s41, 1
          %s134 = scalar_lea.sflag [#allocation3], %s133
          %s135 = sand.u32 %s41, 1
          %s136 = smul.addr %s135, 64
          %s137 = scalar_lea.vmem [#allocation2], %s136
          %s138 = sadd.s32 %s24, %s25
          %s140 = ssub.s32 1024, 1024
          %141 = vsyncadd %s134, %s140
          %s142 = smul.addr %s138, 128
          %s143 = scalar_lea.hbm %s0, %s142
          %s144 = sshll.u32 %s137, 4
          %s145 = int_to_ptr.vmem [resolvable:$true] %s144
          %150 = dma.hbm_to_vmem [thread:$0]  %s143, 1024, %s145, %s134, 256, 128, 8
        $region20: #{tpu_custom_call.1} parent=15 // pred_fallthru
          _
        // Predicated region
        $region21: #{tpu_custom_call.1} parent=15 // pred_check
          %p151 = pneg %p79
        $region22: #{tpu_custom_call.1} parent=15 // pred_check_branch
          %153 = sbr.rel (%p151) target = $region24
        $region23: #{tpu_custom_call.1} parent=15 // pred_region
          %s154 = sand.u32 %s69, 1
          %s155 = scalar_lea.sflag [#allocation6], %s154
          %s156 = sand.u32 %s69, 1
          %s157 = smul.addr %s156, 8
          %s158 = scalar_lea.vmem [#allocation5], %s157
          %s159 = sadd.s32 %s24, %s25
          %s161 = ssub.s32 128, 128
          %162 = vsyncadd %s155, %s161
          %s163 = smul.addr %s159, 128
          %s164 = scalar_lea.hbm %s1, %s163
          %s166 = sshll.u32 %s158, 4
          %s167 = int_to_ptr.vmem [resolvable:$true] %s166
          %169 = dma.hbm_to_vmem [thread:$0]  %s164, 128, %s167, %s155
        $region24: #{tpu_custom_call.1} parent=15 // pred_fallthru
          _
      $region16: #{tpu_custom_call.1} parent=5 // pred_fallthru
        _
      %p170 = scmp.le.s32.totalorder 1, %s17
      %p171 = scmp.lt.s32.totalorder %s17, 3
      %p172 = pnand %p170, %p171
      %p173 = pneg %p172
      // Predicated region
      $region25: #{tpu_custom_call.1} parent=5 // pred_check
        _
      $region26: #{tpu_custom_call.1} parent=5 // pred_check_branch
        %175 = sbr.rel (%p172) target = $region28
      $region27: #{tpu_custom_call.1} parent=5 // pred_region
        %s176 = ssub.s32 %s17, 1
        %s177 = sand.u32 %s44, 1
        %s178 = scalar_lea.sflag [#allocation3], %s177
        %s179 = sand.u32 %s44, 1
        %s180 = smul.addr %s179, 64
        %s181 = scalar_lea.vmem [#allocation2], %s180
        // Predicated region
        $region29: #{tpu_custom_call.1} parent=27 // pred_check
          %p182 = pneg %p57
        $region30: #{tpu_custom_call.1} parent=27 // pred_check_branch
          %184 = sbr.rel (%p182) target = $region32
        $region31: #{tpu_custom_call.1} parent=27 // pred_region
          %185 = dma.done %s178, 1024
        $region32: #{tpu_custom_call.1} parent=27 // pred_fallthru
          _
        %s186 = sand.u32 %s72, 1
        %s187 = scalar_lea.sflag [#allocation6], %s186
        %s188 = sand.u32 %s72, 1
        %s189 = smul.addr %s188, 8
        %s190 = scalar_lea.vmem [#allocation5], %s189
        // Predicated region
        $region33: #{tpu_custom_call.1} parent=27 // pred_check
          %p191 = pneg %p85
        $region34: #{tpu_custom_call.1} parent=27 // pred_check_branch
          %193 = sbr.rel (%p191) target = $region36
        $region35: #{tpu_custom_call.1} parent=27 // pred_region
          %194 = dma.done %s187, 128
        $region36: #{tpu_custom_call.1} parent=27 // pred_fallthru
          _
        %s195 = sand.u32 %s44, 1
        %s196 = scalar_lea.sflag [#allocation3], %s195
        %s197 = sand.u32 %s44, 1
        %s198 = smul.addr %s197, 64
        %s199 = scalar_lea.vmem [#allocation2], %s198
        %p200 = pneg %p57
        %p201 = pneg %p54
        %s202 = sand.u32 %s72, 1
        %s203 = scalar_lea.sflag [#allocation6], %s202
        %s204 = sand.u32 %s72, 1
        %s205 = smul.addr %s204, 8
        %s206 = scalar_lea.vmem [#allocation5], %s205
        %p207 = pneg %p85
        %p208 = pneg %p82
        %p209 = pneg %p111
        %p210 = pneg %p108
        %s211 = sand.u32 %s98, 1
        %s212 = scalar_lea.sflag [#allocation4], %s211
        %s213 = sand.u32 %s98, 1
        %s214 = smul.addr %s213, 8
        %s215 = scalar_lea.vmem [#allocation7], %s214
        %s216 = sadd.s32 %s26, %s27
        %s217 = sadd.s32 %s26, %s27
        %p218 = scmp.eq.s32.totalorder %s27, 0
        // Predicated region
        $region37: #{tpu_custom_call.1} parent=27 // pred_check
          %p219 = pneg %p218
        $region38: #{tpu_custom_call.1} parent=27 // pred_check_branch
          %221 = sbr.rel (%p219) target = $region40
        $region39: #{tpu_custom_call.1} parent=27 // pred_region
          %222 = vst [vmem:[%s215] sm:$0xff] 0.0
        $region40: #{tpu_custom_call.1} parent=27 // pred_fallthru
          _
        %v223 = vld [vmem:[%s190] sm:$0xff]
        %v224 = vld [vmem:[%s181] sm:$0xff]
        %v225 = vsub.f32 %v224, %v223
        %v226 = vadd.f32 %v225, 0.0
        %v227 = vmul.f32 %v225, %v225
        %v228 = vadd.f32 %v227, 0.0
        %s229 = scalar_lea.vmem %s181, 8 [#allocation2]
        %v230 = vld [vmem:[%s229] sm:$0xff]
        %v231 = vsub.f32 %v230, %v223
        %v232 = vadd.f32 %v226, %v231
        %v233 = vmul.f32 %v231, %v231
        %v234 = vadd.f32 %v228, %v233
        %s235 = scalar_lea.vmem %s181, 16 [#allocation2]
        %v236 = vld [vmem:[%s235] sm:$0xff]
        %v237 = vsub.f32 %v236, %v223
        %v238 = vadd.f32 %v232, %v237
        %v239 = vmul.f32 %v237, %v237
        %v240 = vadd.f32 %v234, %v239
        %s241 = scalar_lea.vmem %s181, 24 [#allocation2]
        %v242 = vld [vmem:[%s241] sm:$0xff]
        %v243 = vsub.f32 %v242, %v223
        %v244 = vadd.f32 %v238, %v243
        %v245 = vmul.f32 %v243, %v243
        %v246 = vadd.f32 %v240, %v245
        %s247 = scalar_lea.vmem %s181, 32 [#allocation2]
        %v248 = vld [vmem:[%s247] sm:$0xff]
        %v249 = vsub.f32 %v248, %v223
        %v250 = vadd.f32 %v244, %v249
        %v251 = vmul.f32 %v249, %v249
        %v252 = vadd.f32 %v246, %v251
        %s253 = scalar_lea.vmem %s181, 40 [#allocation2]
        %v254 = vld [vmem:[%s253] sm:$0xff]
        %v255 = vsub.f32 %v254, %v223
        %v256 = vadd.f32 %v250, %v255
        %v257 = vmul.f32 %v255, %v255
        %v258 = vadd.f32 %v252, %v257
        %s259 = scalar_lea.vmem %s181, 48 [#allocation2]
        %v260 = vld [vmem:[%s259] sm:$0xff]
        %v261 = vsub.f32 %v260, %v223
        %v262 = vadd.f32 %v256, %v261
        %v263 = vmul.f32 %v261, %v261
        %v264 = vadd.f32 %v258, %v263
        %s265 = scalar_lea.vmem %s181, 56 [#allocation2]
        %v266 = vld [vmem:[%s265] sm:$0xff]
        %v267 = vsub.f32 %v266, %v223
        %v268 = vadd.f32 %v262, %v267
        %v269 = vmul.f32 %v267, %v267
        %v270 = vadd.f32 %v264, %v269
        %v271 = vmul.f32 %v268, 0.125
        %v272 = vmul.f32 %v271, %v271
        %v273 = vmul.f32 %v272, 8.0
        %v274 = vsub.f32 %v270, %v273
        %v275 = vmul.f32 %v274, 0.14285715
        %v276 = vmax.f32 %v275, 0.0
        %v277 = vrsqrt.pop %v276
        %v278 = vmul.f32 %v276, %v277
        %vm279 = vcmp.eq.f32.partialorder %v276, inf
        %v280 = vsel %vm279, %v276, %v278
        %vm281 = vcmp.eq.f32.partialorder %v276, 0.0
        %v282 = vand.u32 %v276, 2147483648
        %v283 = vsel %vm281, %v282, %v280
        %v284 = vadd.f32 %v283, 0.001
        %v285 = vrcp.pop %v284
        %v286 = vmul.f32 %v271, %v285
        %v287 = vmul.f32 %v286, %v286
        %v288 = vmul.f32 %v287, -0.5
        %v289 = vlog2.pop %v284
        %v290 = vmul.f32 %v289, 0.6931472
        %v291 = vsub.f32 %v288, %v290
        %v292 = vld [vmem:[%s215] sm:$0xff]
        %v293 = vadd.f32 %v292, %v291
        %294 = vst [vmem:[%s215] sm:$0xff] %v293
        %s295 = sand.u32 %s98, 1
        %s296 = scalar_lea.sflag [#allocation4], %s295
        %s297 = sand.u32 %s98, 1
        %s298 = smul.addr %s297, 8
        %s299 = scalar_lea.vmem [#allocation7], %s298
        // Predicated region
        $region41: #{tpu_custom_call.1} parent=27 // pred_check
          %p300 = pneg %p108
        $region42: #{tpu_custom_call.1} parent=27 // pred_check_branch
          %302 = sbr.rel (%p300) target = $region44
        $region43: #{tpu_custom_call.1} parent=27 // pred_region
          %s304 = ssub.s32 128, 128
          %305 = vsyncadd %s296, %s304
          %s306 = smul.addr %s26, 128
          %s307 = scalar_lea.hbm %s2, %s306
          %s309 = sshll.u32 %s299, 4
          %s310 = int_to_ptr.vmem [resolvable:$true] %s309
          %312 = dma.vmem_to_hbm [thread:$0]  %s310, 128, %s307, %s296
        $region44: #{tpu_custom_call.1} parent=27 // pred_fallthru
          _
      $region28: #{tpu_custom_call.1} parent=5 // pred_fallthru
        _
      %p313 = scmp.le.s32.totalorder 2, %s17
      // Predicated region
      $region45: #{tpu_custom_call.1} parent=5 // pred_check
        %p314 = pneg %p313
      $region46: #{tpu_custom_call.1} parent=5 // pred_check_branch
        %316 = sbr.rel (%p314) target = $region48
      $region47: #{tpu_custom_call.1} parent=5 // pred_region
        %s317 = ssub.s32 %s17, 2
        // Predicated region
        $region49: #{tpu_custom_call.1} parent=47 // pred_check
          %p318 = pneg %p114
        $region50: #{tpu_custom_call.1} parent=47 // pred_check_branch
          %320 = sbr.rel (%p318) target = $region52
        $region51: #{tpu_custom_call.1} parent=47 // pred_region
          %s321 = sand.u32 %s99, 1
          %s322 = scalar_lea.sflag [#allocation4], %s321
          %s323 = sand.u32 %s99, 1
          %s324 = smul.addr %s323, 8
          %s325 = scalar_lea.vmem [#allocation7], %s324
          %326 = dma.done %s322, 128
        $region52: #{tpu_custom_call.1} parent=47 // pred_fallthru
          _
      $region48: #{tpu_custom_call.1} parent=5 // pred_fallthru
        _
    $region6: #{tpu_custom_call.1} parent=1 // loop_footer
      %s21 = sadd.s32 1, %s17
    $region7: #{tpu_custom_call.1} parent=1 // loop_footer_branch
      %16 = sbr.rel target = $region3
    $region8: #{tpu_custom_call.1} parent=1 // loop_exit
      _
    %327 = vsyncpa [#allocation3], 1
    %s328 = scalar_lea.sflag [#allocation3], 1
    %329 = vsyncpa %s328, 1
    %330 = vsyncpa [#allocation6], 1
    %s331 = scalar_lea.sflag [#allocation6], 1
    %332 = vsyncpa %s331, 1
    %333 = vsyncpa [#allocation4], 1
    %s334 = scalar_lea.sflag [#allocation4], 1
    %335 = vsyncpa %s334, 1

</llo_original>
